<compile_context>
chip_gen: v7x
topology: tpu7x:2x2x1
jax: 0.10.0
libtpu: 0.0.40
codegen_flags: <defaults>
</compile_context>

<pallas_src>
import math

import jax
import jax.numpy as jnp
from jax.experimental import pallas as pl
from jax.experimental.pallas import tpu as pltpu


def _round_up(x, m):
    return ((x + m - 1) // m) * m


# ---------------------------------------------------------------------------
# Pallas kernel: one stage tile = GEMM -> BN affine -> PReLU -> channel max
# ---------------------------------------------------------------------------
def _stage_kernel(a_ref, p_ref, w_ref, scale_ref, shift_ref, sp_ref, y_ref):
    # a_ref:     (1,)        PReLU slope (SMEM scalar)
    # p_ref:     (K, TM)     im2col patches^T tile (bf16 or f32)
    # w_ref:     (Cout, K)   conv weights (bf16 or f32)
    # scale_ref: (Cout, 1)   folded BN scale = gamma / sqrt(var + eps)
    # shift_ref: (Cout, 1)   folded BN shift = beta - mean * scale
    # sp_ref:    (Cout, TM)  stage output^T (lane-dense)
    # y_ref:     (1, TM)     channel max (lane-dense)
    acc = jnp.dot(w_ref[...], p_ref[...], preferred_element_type=jnp.float32)
    out = acc * scale_ref[...] + shift_ref[...]
    a = a_ref[0]
    out = jnp.where(out >= 0.0, out, out * a)
    sp_ref[...] = out
    y_ref[...] = jnp.max(out, axis=0, keepdims=True)


def _im2col_T(inp, dilation):
    """inp: (Cin, N, H, W) -> patches^T (Cin*9, N*H*W); K order = (cin, ky, kx)."""
    Cin, N, H, W = inp.shape
    p = dilation  # padding == dilation for every stage of the PyTorch module
    xpad = jnp.pad(inp, ((0, 0), (0, 0), (p, p), (p, p)))
    taps = []
    for ky in range(3):
        for kx in range(3):
            oy, ox = ky * dilation, kx * dilation
            taps.append(xpad[:, :, oy:oy + H, ox:ox + W])      # (Cin, N, H, W)
    pat = jnp.stack(taps, axis=1)                              # (Cin, 9, N, H, W)
    return pat.reshape(Cin * 9, N * H * W)                     # (K, M)


def conv_bn_prelu_max(inp, w_co_k, scale, shift, a, dilation, *,
                      tm=2048, dot_dtype=jnp.bfloat16):
    """One stage in channels-first layout.

    inp: (Cin, N, H, W)  ->  sp: (Cout, N, H, W), y: (1, N, H, W)
    """
    Cin, N, H, W = inp.shape
    Cout, K = w_co_k.shape
    M = N * H * W

    patches = _im2col_T(inp, dilation).astype(dot_dtype)       # (K, M)
    tm_eff = min(tm, _round_up(M, 128))                        # lane-aligned tile
    M_pad = _round_up(M, tm_eff)
    if M_pad != M:
        patches = jnp.pad(patches, ((0, 0), (0, M_pad - M)))

    grid = (pl.cdiv(M_pad, tm_eff),)
    spT, yT = pl.pallas_call(
        _stage_kernel,
        out_shape=(jax.ShapeDtypeStruct((Cout, M_pad), jnp.float32),
                   jax.ShapeDtypeStruct((1, M_pad), jnp.float32)),
        grid=grid,
        in_specs=[
            pl.BlockSpec(memory_space=pltpu.MemorySpace.SMEM),   # PReLU scalar
            pl.BlockSpec((K, tm_eff), lambda i: (0, i)),         # patches^T tile
            pl.BlockSpec((Cout, K), lambda i: (0, 0)),           # weights
            pl.BlockSpec((Cout, 1), lambda i: (0, 0)),           # BN scale
            pl.BlockSpec((Cout, 1), lambda i: (0, 0)),           # BN shift
        ],
        out_specs=(pl.BlockSpec((Cout, tm_eff), lambda i: (0, i)),
                   pl.BlockSpec((1, tm_eff), lambda i: (0, i))),
        compiler_params=pltpu.CompilerParams(
            dimension_semantics=("parallel",),
            vmem_limit_bytes=32 * 1024 * 1024),
    )(a, patches, w_co_k.astype(dot_dtype), scale, shift)

    sp = spT[:, :M].reshape(Cout, N, H, W)
    y = yT[:, :M].reshape(1, N, H, W)
    return sp, y


# ---------------------------------------------------------------------------
# Parameter construction (deterministic, mirrors weight_init / module defaults)
# ---------------------------------------------------------------------------
def make_params(key, scales, channel):
    width = math.ceil(channel / scales)
    dilations = [1, 2, 4, 6, 8]
    eps = 1e-5
    params = []
    for i in range(scales - 1):
        cin = width if (scales == 6 and i == 0) else width + 1
        key, wk = jax.random.split(key)
        fan_in = cin * 9
        std = math.sqrt(2.0 / fan_in)                    # kaiming_normal fan_in, relu
        w = jax.random.normal(wk, (width, cin, 3, 3), jnp.float32) * std   # OIHW
        w_mat = w.reshape(width, cin * 9)                # (Cout, K)
        gamma = jnp.ones((width,), jnp.float32)
        beta = jnp.zeros((width,), jnp.float32)
        rmean = jnp.zeros((width,), jnp.float32)
        rvar = jnp.ones((width,), jnp.float32)
        scale = (gamma / jnp.sqrt(rvar + eps)).reshape(width, 1)
        shift = (beta - rmean * gamma / jnp.sqrt(rvar + eps)).reshape(width, 1)
        a = jnp.full((1,), 0.25, jnp.float32)            # nn.PReLU() default
        params.append(dict(w_oihw=w, w_mat=w_mat, scale=scale, shift=shift,
                           a=a, dilation=dilations[i]))
    return params


# ---------------------------------------------------------------------------
# SplitConvBlock.forward (channels-first flat layout end-to-end)
# ---------------------------------------------------------------------------
def split_conv_block(x, y, params, scales, channel, *, tm=2048,
                     dot_dtype=jnp.bfloat16):
    width = math.ceil(channel / scales)
    x_t = jnp.transpose(x, (1, 0, 2, 3))                         # (C, N, H, W)
    y_t = None if y is None else jnp.transpose(y, (1, 0, 2, 3))  # (1, N, H, W)
    sps = []
    for i in range(scales - 1):
        chunk = x_t[i * width:(i + 1) * width]
        if i == 0 and y_t is None:
            inp = chunk
        else:
            inp = jnp.concatenate([chunk, y_t], axis=0)
        p = params[i]
        sp, y_t = conv_bn_prelu_max(inp, p["w_mat"], p["scale"], p["shift"],
                                    p["a"], p["dilation"],
                                    tm=tm, dot_dtype=dot_dtype)
        sps.append(sp)
    out_t = jnp.concatenate(sps + [x_t[(scales - 1) * width: scales * width], y_t],
                            axis=0)
    return jnp.transpose(out_t, (1, 0, 2, 3))                    # back to NCHW


# ---------------------------------------------------------------------------
# Pure-JAX reference (lax conv, f32) for self-check
# ---------------------------------------------------------------------------
def split_conv_block_ref(x, y, params, scales, channel):
    width = math.ceil(channel / scales)
    spx = [x[:, i * width:(i + 1) * width] for i in range(scales)]
    sps = []
    cur_y = y
    for i in range(scales - 1):
        if i == 0 and cur_y is None:
            inp = spx[0]
        else:
            inp = jnp.concatenate([spx[i], cur_y], axis=1)
        p = params[i]
        d = p["dilation"]
        out = jax.lax.conv_general_dilated(
            inp, p["w_oihw"], window_strides=(1, 1),
            padding=[(d, d), (d, d)], rhs_dilation=(d, d),
            dimension_numbers=("NCHW", "OIHW", "NCHW"))
        out = out * p["scale"].reshape(1, -1, 1, 1) + p["shift"].reshape(1, -1, 1, 1)
        out = jnp.where(out >= 0.0, out, p["a"][0] * out)
        sps.append(out)
        cur_y = jnp.max(out, axis=1, keepdims=True)
    return jnp.concatenate(sps + [spx[scales - 1], cur_y], axis=1)


if __name__ == "__main__":
    scales, channel = 4, 16          # width = ceil(16/4) = 4
    N, H, W = 2, 16, 16

    key = jax.random.PRNGKey(0)
    k_x, k_y, k_p = jax.random.split(key, 3)
    x = jax.random.normal(k_x, (N, channel, H, W), jnp.float32)
    y = jax.random.normal(k_y, (N, 1, H, W), jnp.float32)
    params = make_params(k_p, scales, channel)

    # Optimized bf16 path (default).
    out = split_conv_block(x, y, params, scales, channel)
    out = jax.block_until_ready(out)

    width = math.ceil(channel / scales)
    expected_c = (scales - 1) * width + width + 1            # sp1..sp3, spx[3], y
    assert out.shape == (N, expected_c, H, W), out.shape

    ref = split_conv_block_ref(x, y, params, scales, channel)
    ref = jax.block_until_ready(ref)
    err_bf16 = float(jnp.max(jnp.abs(out - ref)))
    assert err_bf16 < 1e-1, err_bf16                         # bf16 GEMM tolerance

    # Tight numerical check with f32 GEMM operands (same kernel / layout).
    out_f32 = split_conv_block(x, y, params, scales, channel,
                               dot_dtype=jnp.float32)
    out_f32 = jax.block_until_ready(out_f32)
    assert jnp.allclose(out_f32, ref, atol=1e-4, rtol=1e-4), \
        float(jnp.max(jnp.abs(out_f32 - ref)))

    print("KERNEL_OK")
</pallas_src>

<mosaic_0001>
module attributes {stable_mosaic.version = 11 : i64} {
  func.func @_stage_kernel(%arg0: i32, %arg1: memref<1xf32, #tpu.memory_space<smem>>, %arg2: memref<45x512xbf16, #tpu.memory_space<vmem>>, %arg3: memref<4x45xbf16, #tpu.memory_space<vmem>>, %arg4: memref<4x1xf32, #tpu.memory_space<vmem>>, %arg5: memref<4x1xf32, #tpu.memory_space<vmem>>, %arg6: memref<4x512xf32, #tpu.memory_space<vmem>>, %arg7: memref<1x512xf32, #tpu.memory_space<vmem>>) attributes {dimension_semantics = [#tpu.dimension_semantics<parallel>], iteration_bounds = array<i64: 1>, scalar_prefetch = 0 : i64, scratch_operands = 0 : i64, tpu.core_type = #tpu.core_type<tc>, window_params = [{transform_indices = @transform_0, window_bounds = array<i64: 1>}, {transform_indices = @transform_1, window_bounds = array<i64: 45, 512>}, {pipeline_mode = #tpu.pipeline_mode<synchronous>, transform_indices = @transform_2, window_bounds = array<i64: 4, 45>}, {pipeline_mode = #tpu.pipeline_mode<synchronous>, transform_indices = @transform_3, window_bounds = array<i64: 4, 1>}, {pipeline_mode = #tpu.pipeline_mode<synchronous>, transform_indices = @transform_4, window_bounds = array<i64: 4, 1>}, {transform_indices = @transform_5, window_bounds = array<i64: 4, 512>}, {transform_indices = @transform_6, window_bounds = array<i64: 1, 512>}]} {
    %c0 = arith.constant 0 : index
    %c0_0 = arith.constant 0 : index
    %0 = vector.load %arg3[%c0, %c0_0] : memref<4x45xbf16, #tpu.memory_space<vmem>>, vector<4x45xbf16>
    %c0_1 = arith.constant 0 : index
    %c0_2 = arith.constant 0 : index
    %1 = vector.load %arg2[%c0_1, %c0_2] : memref<45x512xbf16, #tpu.memory_space<vmem>>, vector<45x512xbf16>
    %cst = arith.constant dense<0.000000e+00> : vector<4x512xf32>
    %2 = tpu.matmul %0, %1, %cst {dimension_numbers = #tpu.dot_dimension_numbers<[1], [0], [0], [1], [0, 0, 1, 1], [], []>} : vector<4x45xbf16>, vector<45x512xbf16>, vector<4x512xf32> -> vector<4x512xf32>
    %c0_3 = arith.constant 0 : index
    %c0_4 = arith.constant 0 : index
    %3 = vector.load %arg4[%c0_3, %c0_4] : memref<4x1xf32, #tpu.memory_space<vmem>>, vector<4x1xf32>
    %4 = vector.broadcast %3 : vector<4x1xf32> to vector<4x512xf32>
    %5 = arith.mulf %2, %4 : vector<4x512xf32>
    %c0_5 = arith.constant 0 : index
    %c0_6 = arith.constant 0 : index
    %6 = vector.load %arg5[%c0_5, %c0_6] : memref<4x1xf32, #tpu.memory_space<vmem>>, vector<4x1xf32>
    %7 = vector.broadcast %6 : vector<4x1xf32> to vector<4x512xf32>
    %8 = arith.addf %5, %7 : vector<4x512xf32>
    %c0_7 = arith.constant 0 : index
    %9 = memref.load %arg1[%c0_7] : memref<1xf32, #tpu.memory_space<smem>>
    %cst_8 = arith.constant 0.000000e+00 : f32
    %10 = vector.broadcast %cst_8 : f32 to vector<4x512xf32>
    %11 = arith.cmpf oge, %8, %10 : vector<4x512xf32>
    %12 = vector.broadcast %9 : f32 to vector<4x512xf32>
    %13 = arith.mulf %8, %12 : vector<4x512xf32>
    %14 = arith.select %11, %8, %13 : vector<4x512xi1>, vector<4x512xf32>
    %c0_9 = arith.constant 0 : index
    %c0_10 = arith.constant 0 : index
    %15 = vector.load %arg6[%c0_9, %c0_10] : memref<4x512xf32, #tpu.memory_space<vmem>>, vector<4x512xf32>
    tpu.vector_store %arg6[%c0_9, %c0_10], %14 {strides = array<i32>} : memref<4x512xf32, #tpu.memory_space<vmem>>, vector<4x512xf32>,
    %cst_11 = arith.constant dense<0xFF800000> : vector<512xf32>
    %16 = vector.multi_reduction <maximumf>, %14, %cst_11 [0] : vector<4x512xf32> to vector<512xf32>
    %17 = vector.shape_cast %16 : vector<512xf32> to vector<1x512xf32>
    %c0_12 = arith.constant 0 : index
    %c0_13 = arith.constant 0 : index
    %18 = vector.load %arg7[%c0_12, %c0_13] : memref<1x512xf32, #tpu.memory_space<vmem>>, vector<1x512xf32>
    tpu.vector_store %arg7[%c0_12, %c0_13], %17 {strides = array<i32>} : memref<1x512xf32, #tpu.memory_space<vmem>>, vector<1x512xf32>,
    return
  }
  func.func @transform_0(%arg0: i32) -> i32 {
    %c0_i32 = arith.constant 0 : i32
    %c0_i32_0 = arith.constant 0 : i32
    return %c0_i32 : i32
  }
  func.func @transform_1(%arg0: i32) -> (i32, i32) {
    %c0_i32 = arith.constant 0 : i32
    %c0_i32_0 = arith.constant 0 : i32
    return %c0_i32, %arg0 : i32, i32
  }
  func.func @transform_2(%arg0: i32) -> (i32, i32) {
    %c0_i32 = arith.constant 0 : i32
    %c0_i32_0 = arith.constant 0 : i32
    %c0_i32_1 = arith.constant 0 : i32
    return %c0_i32, %c0_i32_0 : i32, i32
  }
  func.func @transform_3(%arg0: i32) -> (i32, i32) {
    %c0_i32 = arith.constant 0 : i32
    %c0_i32_0 = arith.constant 0 : i32
    %c0_i32_1 = arith.constant 0 : i32
    return %c0_i32, %c0_i32_0 : i32, i32
  }
  func.func @transform_4(%arg0: i32) -> (i32, i32) {
    %c0_i32 = arith.constant 0 : i32
    %c0_i32_0 = arith.constant 0 : i32
    %c0_i32_1 = arith.constant 0 : i32
    return %c0_i32, %c0_i32_0 : i32, i32
  }
  func.func @transform_5(%arg0: i32) -> (i32, i32) {
    %c0_i32 = arith.constant 0 : i32
    %c0_i32_0 = arith.constant 0 : i32
    return %c0_i32, %arg0 : i32, i32
  }
  func.func @transform_6(%arg0: i32) -> (i32, i32) {
    %c0_i32 = arith.constant 0 : i32
    %c0_i32_0 = arith.constant 0 : i32
    return %c0_i32, %arg0 : i32, i32
  }
}

</mosaic_0001>

<llo_original>
// kernel: tpu_custom_call.1
$region0: #{tpu_custom_call.1}
  #allocation0 [shape = 'u32[]', space=smem, size = 0x4, offset = 0x4, fixed_abs, tag = 'smem constant byte address 0x4 - core index']
  #allocation1 [shape = 'u32[144,128]{1,0:T(1,128)}', space=vmem, size = 0x12000, scoped, tag = 'internal scratch']
  #allocation2 [shape = 'f32[1]{0:T(128)S(6)}', space=smem, size = 0x200, scoped, tag = 'scoped memory for tpu_custom_call.1']
  %s0 = inlined_call_operand.<no memory space> [shape: f32[1], index: 0, kind: input, shape index: {}]
  %s1 = inlined_call_operand.hbm [shape: bf16[45,512], index: 1, kind: input, shape index: {}]
  %s2 = inlined_call_operand.vmem [shape: bf16[4,45], index: 2, kind: input, shape index: {}]
  %s3 = inlined_call_operand.vmem [shape: f32[4,1], index: 3, kind: input, shape index: {}]
  %s4 = inlined_call_operand.vmem [shape: f32[4,1], index: 4, kind: input, shape index: {}]
  %s5 = inlined_call_operand.hbm [shape: f32[4,512], index: 5, kind: output, shape index: {0}]
  %s6 = inlined_call_operand.hbm [shape: f32[1,512], index: 6, kind: output, shape index: {1}]
  %7 = xla_tuple %s5, %s6
  %s8 = sld [smem:[#allocation0]]
  $region42: #{tpu_custom_call.1} parent=0
    _
  %s10 = ssub.s32 1, %s8
  %s11 = scalar_select 0, %s10, %s8
  %12 = sst [smem:[#allocation2]] %s0
  $region1: #{tpu_custom_call.1} parent=0
    #allocation3 [shape = 'u8[49152]{0}', space=vmem, size = 0xc000, scoped, tag = 'input window, operand 1, single buffered']
    #allocation4 [shape = 's32[1]{0}', space=sflag, size = 0x4, scoped, tag = 'scoped memory for tpu_custom_call.1']
    #allocation5 [shape = 's32[1]{0}', space=sflag, size = 0x4, scoped, tag = 'scoped memory for tpu_custom_call.1']
    #allocation6 [shape = 'u8[8192]{0}', space=vmem, size = 0x2000, scoped, tag = 'output window, operand 0, single buffered']
    #allocation7 [shape = 'u8[2048]{0}', space=vmem, size = 0x800, scoped, tag = 'output window, operand 1, single buffered']
    #allocation8 [shape = 's32[1]{0}', space=sflag, size = 0x4, scoped, tag = 'scoped memory for tpu_custom_call.1']
    %13 = vsyncpa [#allocation4], 0
    %14 = vsyncpa [#allocation5], 0
    %15 = vsyncpa [#allocation8], 0
    // Predicated region
    $region2: #{tpu_custom_call.1} parent=1 // pred_check
      _
    $region3: #{tpu_custom_call.1} parent=1 // pred_check_branch
      %17 = sbr.rel (0) target = $region5
    $region4: #{tpu_custom_call.1} parent=1 // pred_region
      _
    $region5: #{tpu_custom_call.1} parent=1 // pred_fallthru
      _
    // Predicated region
    $region6: #{tpu_custom_call.1} parent=1 // pred_check
      _
    $region7: #{tpu_custom_call.1} parent=1 // pred_check_branch
      %19 = sbr.rel (0) target = $region9
    $region8: #{tpu_custom_call.1} parent=1 // pred_region
      %s21 = ssub.s32 1536, 1536
      %22 = vsyncadd [#allocation4], %s21
      %s23 = sshll.u32 [#allocation3], 4
      %s24 = int_to_ptr.vmem [resolvable:$true] %s23
      %29 = dma.hbm_to_vmem [thread:$0]  %s1, 1536, %s24, [#allocation4], 256, 256, 16
    $region9: #{tpu_custom_call.1} parent=1 // pred_fallthru
      _
    // Predicated region
    $region10: #{tpu_custom_call.1} parent=1 // pred_check
      _
    $region11: #{tpu_custom_call.1} parent=1 // pred_check_branch
      %31 = sbr.rel (0) target = $region13
    $region12: #{tpu_custom_call.1} parent=1 // pred_region
      _
    $region13: #{tpu_custom_call.1} parent=1 // pred_fallthru
      _
    // Predicated region
    $region14: #{tpu_custom_call.1} parent=1 // pred_check
      _
    $region15: #{tpu_custom_call.1} parent=1 // pred_check_branch
      %33 = sbr.rel (0) target = $region17
    $region16: #{tpu_custom_call.1} parent=1 // pred_region
      _
    $region17: #{tpu_custom_call.1} parent=1 // pred_fallthru
      _
    // Predicated region
    $region18: #{tpu_custom_call.1} parent=1 // pred_check
      _
    $region19: #{tpu_custom_call.1} parent=1 // pred_check_branch
      %35 = sbr.rel (0) target = $region21
    $region20: #{tpu_custom_call.1} parent=1 // pred_region
      _
    $region21: #{tpu_custom_call.1} parent=1 // pred_fallthru
      _
    // Predicated region
    $region22: #{tpu_custom_call.1} parent=1 // pred_check
      _
    $region23: #{tpu_custom_call.1} parent=1 // pred_check_branch
      %37 = sbr.rel (0) target = $region25
    $region24: #{tpu_custom_call.1} parent=1 // pred_region
      %38 = dma.done [#allocation4], 1536
    $region25: #{tpu_custom_call.1} parent=1 // pred_fallthru
      _
    %v40 = vld [vmem:[%s2] sm:$0x3]
    %v41 = vld [vmem:[#allocation3] sm:$0xff]
    %v42 = vld [vmem:[#allocation3 + $0x8] sm:$0xff]
    %v43 = vld [vmem:[#allocation3 + $0x10] sm:$0xff]
    %v44 = vld [vmem:[#allocation3 + $0x18] sm:$0xff]
    %v45 = vld [vmem:[#allocation3 + $0x20] sm:$0xff]
    %v46 = vld [vmem:[#allocation3 + $0x28] sm:$0xff]
    %v47 = vld [vmem:[#allocation3 + $0x30] sm:$0xff]
    %v48 = vld [vmem:[#allocation3 + $0x38] sm:$0xff]
    %v49 = vld [vmem:[#allocation3 + $0x40] sm:$0xff]
    %v50 = vld [vmem:[#allocation3 + $0x48] sm:$0xff]
    %v51 = vld [vmem:[#allocation3 + $0x50] sm:$0x77]
    %v52 = vld [vmem:[#allocation3 + $0x58] sm:$0x77]
    %v65 = vunpack.c.l.b16 %v41
    %v66 = vunpack.c.h.b16 %v41
    %v67 = vunpack.c.l.b16 %v42
    %v68 = vunpack.c.h.b16 %v42
    %v69 = vunpack.c.l.b16 %v43
    %v70 = vunpack.c.h.b16 %v43
    %v71 = vunpack.c.l.b16 %v44
    %v72 = vunpack.c.h.b16 %v44
    %v73 = vunpack.c.l.b16 %v45
    %v74 = vunpack.c.h.b16 %v45
    %v75 = vunpack.c.l.b16 %v46
    %v76 = vunpack.c.h.b16 %v46
    %v77 = vunpack.c.l.b16 %v47
    %v78 = vunpack.c.h.b16 %v47
    %v79 = vunpack.c.l.b16 %v48
    %v80 = vunpack.c.h.b16 %v48
    %v81 = vunpack.c.l.b16 %v49
    %v82 = vunpack.c.h.b16 %v49
    %v83 = vunpack.c.l.b16 %v50
    %v84 = vunpack.c.h.b16 %v50
    %v85 = vunpack.c.l.b16 %v51
    %v86 = vunpack.c.h.b16 %v51
    %v87 = vunpack.c.l.b16 %v52
    %v88 = vunpack.c.h.b16 %v52
    %v89 = vpack.c.b16 %v69, %v65
    %v90 = vpack.c.b16 %v70, %v66
    %v91 = vpack.c.b16 %v71, %v67
    %v92 = vpack.c.b16 %v72, %v68
    %v93 = vpack.c.b16 %v77, %v73
    %v94 = vpack.c.b16 %v78, %v74
    %v95 = vpack.c.b16 %v79, %v75
    %v96 = vpack.c.b16 %v80, %v76
    %v97 = vpack.c.b16 %v85, %v81
    %v98 = vpack.c.b16 %v86, %v82
    %v99 = vpack.c.b16 %v87, %v83
    %v100 = vpack.c.b16 %v88, %v84
    %vm109 = vcmask 367616
    %v111 = vsel %vm109, %v40, 0
    %vm113 = vcmask 1045504
    %vm114 = vcmask 1046528
    %v115 = vsel %vm113, 4294967295, 65535
    %v116 = vsel %vm114, %v115, 0
    %v118 = vand.u32 %v97, %v116
    %v121 = vand.u32 %v98, %v116
    %v124 = vand.u32 %v99, %v116
    %v127 = vand.u32 %v100, %v116
    %129 = vmatprep.subr.bf16.mxu0 %v90
    %130 = vmatpush1.bf16.msra.mxu0 %v89
    %131 = vmatprep.subr.bf16.mxu0 %v94
    %132 = vmatpush1.bf16.msra.mxu0 %v93
    %133 = vmatprep.subr.bf16.mxu0 %v121
    %134 = vmatpush1.bf16.msra.mxu0 %v118
    %135 = vmatprep.subr.bf16.mxu0 0
    %136 = vmatpush1.bf16.msra.mxu0 0
    %137 = vmatprep.subr.bf16.mxu0 0
    %138 = vmatpush1.bf16.msra.mxu0 0
    %139 = vmatprep.subr.bf16.mxu0 0
    %140 = vmatpush1.bf16.msra.mxu0 0
    %141 = vmatprep.subr.bf16.mxu0 0
    %142 = vmatpush1.bf16.msra.mxu0 0
    %143 = vmatprep.subr.bf16.mxu0 0
    %144 = vmatpush1.bf16.msra.mxu0 0
    %145 = vmatprep.subr.bf16.mxu0 0
    %146 = vmatpush1.bf16.msra.mxu0 0
    %147 = vmatprep.subr.bf16.mxu0 0
    %148 = vmatpush1.bf16.msra.mxu0 0
    %149 = vmatprep.subr.bf16.mxu0 0
    %150 = vmatpush1.bf16.msra.mxu0 0
    %151 = vmatprep.subr.bf16.mxu0 0
    %152 = vmatpush1.bf16.msra.mxu0 0
    %153 = vmatprep.subr.bf16.mxu0 0
    %154 = vmatpush1.bf16.msra.mxu0 0
    %155 = vmatprep.subr.bf16.mxu0 0
    %156 = vmatpush1.bf16.msra.mxu0 0
    %157 = vmatprep.subr.bf16.mxu0 0
    %158 = vmatpush1.bf16.msra.mxu0 0
    %159 = vmatprep.subr.bf16.mxu0 0
    %160 = vmatpush1.bf16.msra.mxu0 0
    %161 = vmatprep.mubr.bf16.mxu0 0
    %162 = vmatmul.mubr.bf16.gmra.mrb[0].mxu0 %v111
    %v163 = vpop.f32.mrb[0].mxu0
    %v164 = vadd.f32 0.0, %v163
    %v165 = vpop.f32.mrb[0].mxu0
    %v166 = vadd.f32 0.0, %v165
    %v167 = vpop.f32.mrb[0].mxu0
    %v168 = vpop.f32.mrb[0].mxu0
    %169 = vdwg.mxu0
    %170 = vmatprep.subr.bf16.mxu0 %v92
    %171 = vmatpush1.bf16.msra.mxu0 %v91
    %172 = vmatprep.subr.bf16.mxu0 %v96
    %173 = vmatpush1.bf16.msra.mxu0 %v95
    %174 = vmatprep.subr.bf16.mxu0 %v127
    %175 = vmatpush1.bf16.msra.mxu0 %v124
    %176 = vmatprep.subr.bf16.mxu0 0
    %177 = vmatpush1.bf16.msra.mxu0 0
    %178 = vmatprep.subr.bf16.mxu0 0
    %179 = vmatpush1.bf16.msra.mxu0 0
    %180 = vmatprep.subr.bf16.mxu0 0
    %181 = vmatpush1.bf16.msra.mxu0 0
    %182 = vmatprep.subr.bf16.mxu0 0
    %183 = vmatpush1.bf16.msra.mxu0 0
    %184 = vmatprep.subr.bf16.mxu0 0
    %185 = vmatpush1.bf16.msra.mxu0 0
    %186 = vmatprep.subr.bf16.mxu0 0
    %187 = vmatpush1.bf16.msra.mxu0 0
    %188 = vmatprep.subr.bf16.mxu0 0
    %189 = vmatpush1.bf16.msra.mxu0 0
    %190 = vmatprep.subr.bf16.mxu0 0
    %191 = vmatpush1.bf16.msra.mxu0 0
    %192 = vmatprep.subr.bf16.mxu0 0
    %193 = vmatpush1.bf16.msra.mxu0 0
    %194 = vmatprep.subr.bf16.mxu0 0
    %195 = vmatpush1.bf16.msra.mxu0 0
    %196 = vmatprep.subr.bf16.mxu0 0
    %197 = vmatpush1.bf16.msra.mxu0 0
    %198 = vmatprep.subr.bf16.mxu0 0
    %199 = vmatpush1.bf16.msra.mxu0 0
    %200 = vmatprep.subr.bf16.mxu0 0
    %201 = vmatpush1.bf16.msra.mxu0 0
    %202 = vmatprep.mubr.bf16.mxu0 0
    %203 = vmatmul.mubr.bf16.gmra.mrb[0].mxu0 %v111
    %v204 = vpop.f32.mrb[0].mxu0
    %v205 = vadd.f32 0.0, %v204
    %v206 = vpop.f32.mrb[0].mxu0
    %v207 = vadd.f32 0.0, %v206
    %v208 = vpop.f32.mrb[0].mxu0
    %v209 = vpop.f32.mrb[0].mxu0
    %210 = vdwg.mxu0
    %v211 = vld [vmem:[%s3] sm:$0xf]
    %213 = vset.pattern.permute.xlu0 0
    %214 = vperm.xlu0 %213, %v211
    %v215 = vpop.permute.xlu0 %214
    %v217 = vmul.f32 %v164, %v215
    %v218 = vmul.f32 %v166, %v215
    %v219 = vmul.f32 %v205, %v215
    %v220 = vmul.f32 %v207, %v215
    %v221 = vld [vmem:[%s4] sm:$0xf]
    %223 = vset.pattern.permute.xlu0 0
    %224 = vperm.xlu0 %223, %v221
    %v225 = vpop.permute.xlu0 %224
    %v227 = vadd.f32 %v217, %v225
    %v228 = vadd.f32 %v218, %v225
    %v229 = vadd.f32 %v219, %v225
    %v230 = vadd.f32 %v220, %v225
    %s231 = sld [smem:[#allocation2]]
    %vm232 = vcmp.ge.f32.partialorder %v227, 0.0
    %vm233 = vcmp.ge.f32.partialorder %v228, 0.0
    %vm234 = vcmp.ge.f32.partialorder %v229, 0.0
    %vm235 = vcmp.ge.f32.partialorder %v230, 0.0
    %v236 = vstv %s231
    %v237 = vmul.f32 %v227, %v236
    %v238 = vmul.f32 %v228, %v236
    %v239 = vmul.f32 %v229, %v236
    %v240 = vmul.f32 %v230, %v236
    %v241 = vsel %vm232, %v227, %v237
    %v242 = vsel %vm233, %v228, %v238
    %v243 = vsel %vm234, %v229, %v239
    %v244 = vsel %vm235, %v230, %v240
    %v249 = vcombine.low %v241, %v242
    %v250 = vcombine.low %v243, %v244
    %253 = vst [vmem:[#allocation6] sm:$0xff] %v249
    %254 = vst [vmem:[#allocation6 + $0x8] sm:$0xff] %v250
    %vm255 = vcmask 1043456
    %v256 = vsel %vm255, %v241, -inf
    %v257 = vrot.slane %v256, 4
    %v258 = vmax.f32 %v256, %v257
    %v259 = vrot.slane %v258, 2
    %v260 = vmax.f32 %v258, %v259
    %v261 = vrot.slane %v260, 1
    %v262 = vmax.f32 %v260, %v261
    %v263 = vsel %vm255, %v242, -inf
    %v264 = vrot.slane %v263, 4
    %v265 = vmax.f32 %v263, %v264
    %v266 = vrot.slane %v265, 2
    %v267 = vmax.f32 %v265, %v266
    %v268 = vrot.slane %v267, 1
    %v269 = vmax.f32 %v267, %v268
    %v270 = vsel %vm255, %v243, -inf
    %v271 = vrot.slane %v270, 4
    %v272 = vmax.f32 %v270, %v271
    %v273 = vrot.slane %v272, 2
    %v274 = vmax.f32 %v272, %v273
    %v275 = vrot.slane %v274, 1
    %v276 = vmax.f32 %v274, %v275
    %v277 = vsel %vm255, %v244, -inf
    %v278 = vrot.slane %v277, 4
    %v279 = vmax.f32 %v277, %v278
    %v280 = vrot.slane %v279, 2
    %v281 = vmax.f32 %v279, %v280
    %v282 = vrot.slane %v281, 1
    %v283 = vmax.f32 %v281, %v282
    %v288 = vcombine.low %v262, %v269
    %v289 = vcombine.low %v276, %v283
    %v291 = vunpack.c.l.s4 1966171168
    %v292 = vunpack.c.0.s8 %v291
    %v293 = vlaneseq
    %v294 = vshrl.u32 %v293, 7
    %v295 = vsub.s32 %v292, %v294
    %v296 = vrot.slane %v288, %v295
    %v298 = vunpack.c.l.s4 1966171168
    %v299 = vunpack.c.0.s8 %v298
    %v300 = vlaneseq
    %v301 = vshrl.u32 %v300, 7
    %v302 = vsub.s32 %v299, %v301
    %v303 = vrot.slane %v289, %v302
    %v304 = vcombine.low %v296, %v303
    %v306 = vunpack.c.l.s4 1966171168
    %v307 = vunpack.c.0.s8 %v306
    %v308 = vlaneseq
    %v309 = vshrl.u32 %v308, 7
    %v310 = vsub.s32 %v307, %v309
    %v311 = vrot.slane %v304, %v310
    %v313 = vlaneseq
    %vm314 = vcmp.ge.s32.totalorder %v313, 0
    %vm315 = vcmp.lt.s32.totalorder %v313, 512
    %vm316 = vmand %vm314, %vm315
    %317 = vst.msk [vmem:[#allocation7] sm:$0xf] %vm316, %v311
    // Predicated region
    $region26: #{tpu_custom_call.1} parent=1 // pred_check
      _
    $region27: #{tpu_custom_call.1} parent=1 // pred_check_branch
      %319 = sbr.rel (0) target = $region29
    $region28: #{tpu_custom_call.1} parent=1 // pred_region
      %s321 = ssub.s32 256, 256
      %322 = vsyncadd [#allocation5], %s321
      %s324 = sshll.u32 [#allocation6], 4
      %s325 = int_to_ptr.vmem [resolvable:$true] %s324
      %327 = dma.vmem_to_hbm [thread:$0]  %s325, 256, %s5, [#allocation5]
    $region29: #{tpu_custom_call.1} parent=1 // pred_fallthru
      _
    // Predicated region
    $region30: #{tpu_custom_call.1} parent=1 // pred_check
      _
    $region31: #{tpu_custom_call.1} parent=1 // pred_check_branch
      %329 = sbr.rel (0) target = $region33
    $region32: #{tpu_custom_call.1} parent=1 // pred_region
      %s331 = ssub.s32 64, 64
      %332 = vsyncadd [#allocation8], %s331
      %s334 = sshll.u32 [#allocation7], 4
      %s335 = int_to_ptr.vmem [resolvable:$true] %s334
      %337 = dma.vmem_to_hbm [thread:$0]  %s335, 64, %s6, [#allocation8]
    $region33: #{tpu_custom_call.1} parent=1 // pred_fallthru
      _
    // Predicated region
    $region34: #{tpu_custom_call.1} parent=1 // pred_check
      _
    $region35: #{tpu_custom_call.1} parent=1 // pred_check_branch
      %339 = sbr.rel (0) target = $region37
    $region36: #{tpu_custom_call.1} parent=1 // pred_region
      %340 = dma.done [#allocation5], 256
    $region37: #{tpu_custom_call.1} parent=1 // pred_fallthru
      _
    // Predicated region
    $region38: #{tpu_custom_call.1} parent=1 // pred_check
      _
    $region39: #{tpu_custom_call.1} parent=1 // pred_check_branch
      %342 = sbr.rel (0) target = $region41
    $region40: #{tpu_custom_call.1} parent=1 // pred_region
      %343 = dma.done [#allocation8], 64
    $region41: #{tpu_custom_call.1} parent=1 // pred_fallthru
      _
    %344 = vsyncpa [#allocation4], 1
    %345 = vsyncpa [#allocation5], 1
    %346 = vsyncpa [#allocation8], 1

</llo_original>
